<compile_context>
chip_gen: v7x
topology: tpu7x:2x2x1
jax: 0.10.0
libtpu: 0.0.40
codegen_flags: <defaults>
</compile_context>

<pallas_src>
import functools

import jax
import jax.numpy as jnp
from jax.experimental import pallas as pl
from jax.experimental.pallas import tpu as pltpu

_ROW_ALIGN = 16  # satisfies both f32 (8) and bf16 (16) sublane tiling


def _round_up(x, m):
    return ((x + m - 1) // m) * m


def _vmem_capacity_bytes():
    try:
        return int(pltpu.get_tpu_info().vmem_capacity_bytes)
    except Exception:
        return 64 * 1024 * 1024  # conservative fallback (v7x per-TC VMEM)


def _pick_tm(n, c, itemsize):
    """Largest row tile whose double-buffered tiles fit a conservative VMEM budget."""
    budget = (_vmem_capacity_bytes() * 2) // 5          # ~40% of VMEM for pipelined tiles
    bytes_per_row = 2 * c * itemsize + 2 * 4 + 4        # 2x preds + 2x target + scratch row
    tm = budget // max(bytes_per_row, 1)
    tm = min(tm, 2048)                                  # per-step overhead amortized well before this
    tm = min(tm, _round_up(n, _ROW_ALIGN))
    tm = max(_ROW_ALIGN, (tm // _ROW_ALIGN) * _ROW_ALIGN)
    return int(tm)


def _label_smoothing_kernel(preds_ref, target_ref, out_ref, acc_ref, *,
                            smoothing, total_rows, tm):
    i = pl.program_id(0)

    @pl.when(i == 0)
    def _init():
        acc_ref[...] = jnp.zeros_like(acc_ref)

    x = preds_ref[...].astype(jnp.float32)                        # (TM, C)
    t = target_ref[...]                                           # (TM, 1) int32
    num_classes = x.shape[-1]

    # Numerically-stable logsumexp along the class (lane) axis.
    m = jnp.max(x, axis=-1, keepdims=True)                        # (TM, 1)
    lse = jnp.log(jnp.sum(jnp.exp(x - m), axis=-1, keepdims=True))
    z = m + lse                                                   # (TM, 1)

    # Target logit and full row sum (no one_hot / log_probs materialization).
    class_ids = jax.lax.broadcasted_iota(jnp.int32, x.shape, 1)   # (TM, C)
    x_t = jnp.sum(jnp.where(class_ids == t, x, 0.0), axis=-1, keepdims=True)
    sum_x = jnp.sum(x, axis=-1, keepdims=True)

    # -(log_softmax(x) * smoothed).sum(-1) == (1-s)*(z - x_t) + (s/C)*(C*z - sum_x)
    row_loss = ((1.0 - smoothing) * (z - x_t)
                + (smoothing / num_classes) * (num_classes * z - sum_x))  # (TM, 1)

    # Mask rows that are padding (ragged N support).
    row_ids = i * tm + jax.lax.broadcasted_iota(jnp.int32, (tm, 1), 0)
    valid = (row_ids < total_rows).astype(jnp.float32)

    acc_ref[...] += row_loss * valid

    @pl.when(i == pl.num_programs(0) - 1)
    def _finalize():
        out_ref[0, 0] = jnp.sum(acc_ref[...]) / jnp.float32(total_rows)


def label_smoothing_loss(preds, target, *, smoothing=0.1, tm=None):
    """preds: (N, C) float (f32 or bf16); target: (N,) int. Returns scalar f32 loss."""
    N, C = preds.shape
    itemsize = jnp.dtype(preds.dtype).itemsize

    if tm is None:
        tm = _pick_tm(N, C, itemsize)
    else:
        tm = max(_ROW_ALIGN, _round_up(int(tm), _ROW_ALIGN))

    n_pad = _round_up(N, tm)
    target2d = target.reshape(N, 1).astype(jnp.int32)
    if n_pad != N:
        preds = jnp.pad(preds, ((0, n_pad - N), (0, 0)))
        target2d = jnp.pad(target2d, ((0, n_pad - N), (0, 0)))

    grid = (n_pad // tm,)

    # Raise the scoped VMEM limit so the double-buffered tile compiles on v5e
    # (16 MiB default) while leaving headroom on v7x (64 MiB physical per TC).
    cap = _vmem_capacity_bytes()
    need = tm * (2 * C * itemsize + 2 * 4 + 4) + (2 << 20)
    vmem_limit = int(min(cap * 3 // 4, max(need, 32 * 1024 * 1024)))

    kernel = functools.partial(_label_smoothing_kernel,
                               smoothing=float(smoothing),
                               total_rows=int(N),
                               tm=int(tm))

    cost = pl.CostEstimate(
        flops=6 * n_pad * C,
        transcendentals=n_pad * C + n_pad,
        bytes_accessed=n_pad * C * itemsize + n_pad * 4 + 4,
    )

    out = pl.pallas_call(
        kernel,
        out_shape=jax.ShapeDtypeStruct((1, 1), jnp.float32),
        grid_spec=pltpu.PrefetchScalarGridSpec(
            num_scalar_prefetch=0,
            grid=grid,
            in_specs=[
                pl.BlockSpec((tm, C), lambda i: (i, 0)),   # logits tile
                pl.BlockSpec((tm, 1), lambda i: (i, 0)),   # target tile
            ],
            out_specs=pl.BlockSpec(memory_space=pltpu.MemorySpace.SMEM),
            scratch_shapes=[pltpu.VMEM((tm, 1), jnp.float32)],
        ),
        compiler_params=pltpu.CompilerParams(
            dimension_semantics=("arbitrary",),   # scratch/output accumulate across grid
            vmem_limit_bytes=vmem_limit,
        ),
        cost_estimate=cost,
    )(preds, target2d)
    return out[0, 0]


def _reference_loss(preds, target, smoothing=0.1):
    num_classes = preds.shape[-1]
    one_hot = jax.nn.one_hot(target, num_classes, dtype=jnp.float32)
    smoothed = one_hot * (1.0 - smoothing) + smoothing / num_classes
    log_probs = jax.nn.log_softmax(preds.astype(jnp.float32), axis=-1)
    return -jnp.sum(log_probs * smoothed, axis=-1).mean()


if __name__ == "__main__":
    key = jax.random.PRNGKey(0)
    k_preds, k_tgt = jax.random.split(key)

    smoothing = 0.1
    N, C = 128, 32   # small demo: 128 examples, 32 classes

    preds = jax.random.normal(k_preds, (N, C), dtype=jnp.float32)
    target = jax.random.randint(k_tgt, (N,), 0, C, dtype=jnp.int32)

    ref = jax.block_until_ready(_reference_loss(preds, target, smoothing))

    # 1) Auto (VMEM-aware) tile -> collapses to a single grid step for this toy shape.
    loss = jax.block_until_ready(
        label_smoothing_loss(preds, target, smoothing=smoothing))
    assert jnp.allclose(loss, ref, rtol=1e-5, atol=1e-5), (loss, ref)

    # 2) Forced small tile -> multi-step grid, exercises VMEM-scratch accumulation.
    loss_tiled = jax.block_until_ready(
        label_smoothing_loss(preds, target, smoothing=smoothing, tm=32))
    assert jnp.allclose(loss_tiled, ref, rtol=1e-5, atol=1e-5), (loss_tiled, ref)

    # 3) Ragged batch -> exercises padding + in-kernel row masking.
    N2 = 100
    preds2, target2 = preds[:N2], target[:N2]
    ref2 = jax.block_until_ready(_reference_loss(preds2, target2, smoothing))
    loss_ragged = jax.block_until_ready(
        label_smoothing_loss(preds2, target2, smoothing=smoothing, tm=32))
    assert jnp.allclose(loss_ragged, ref2, rtol=1e-5, atol=1e-5), (loss_ragged, ref2)

    print("KERNEL_OK")
</pallas_src>

<mosaic_0001>
module attributes {stable_mosaic.version = 11 : i64} {
  func.func @_label_smoothing_kernel(%arg0: i32, %arg1: memref<128x32xf32, #tpu.memory_space<vmem>>, %arg2: memref<128x1xi32, #tpu.memory_space<vmem>>, %arg3: memref<1x1xf32, #tpu.memory_space<smem>>, %arg4: memref<128x1xf32, #tpu.memory_space<vmem>>) attributes {dimension_semantics = [#tpu.dimension_semantics<arbitrary>], iteration_bounds = array<i64: 1>, scalar_prefetch = 0 : i64, scratch_operands = 1 : i64, tpu.core_type = #tpu.core_type<tc>, window_params = [{transform_indices = @transform_0, window_bounds = array<i64: 128, 32>}, {transform_indices = @transform_1, window_bounds = array<i64: 128, 1>}, {transform_indices = @transform_2, window_bounds = array<i64: 1, 1>}]} {
    %c0_i32 = arith.constant 0 : i32
    %0 = arith.cmpi eq, %arg0, %c0_i32 : i32
    %1 = arith.extui %0 : i1 to i32
    %c0_i32_0 = arith.constant 0 : i32
    %2 = arith.cmpi ne, %1, %c0_i32_0 : i32
    scf.if %2 {
      %cst_18 = arith.constant 0.000000e+00 : f32
      %47 = vector.broadcast %cst_18 : f32 to vector<128x1xf32>
      %c0_19 = arith.constant 0 : index
      %c0_20 = arith.constant 0 : index
      %48 = vector.load %arg4[%c0_19, %c0_20] : memref<128x1xf32, #tpu.memory_space<vmem>>, vector<128x1xf32>
      tpu.vector_store %arg4[%c0_19, %c0_20], %47 {strides = array<i32>} : memref<128x1xf32, #tpu.memory_space<vmem>>, vector<128x1xf32>,
    } else {
    }
    %c0 = arith.constant 0 : index
    %c0_1 = arith.constant 0 : index
    %3 = vector.load %arg1[%c0, %c0_1] : memref<128x32xf32, #tpu.memory_space<vmem>>, vector<128x32xf32>
    %c0_2 = arith.constant 0 : index
    %c0_3 = arith.constant 0 : index
    %4 = vector.load %arg2[%c0_2, %c0_3] : memref<128x1xi32, #tpu.memory_space<vmem>>, vector<128x1xi32>
    %cst = arith.constant dense<0xFF800000> : vector<128xf32>
    %5 = vector.multi_reduction <maximumf>, %3, %cst [1] : vector<128x32xf32> to vector<128xf32>
    %6 = vector.shape_cast %5 : vector<128xf32> to vector<128x1xf32>
    %7 = vector.broadcast %6 : vector<128x1xf32> to vector<128x32xf32>
    %8 = arith.subf %3, %7 : vector<128x32xf32>
    %9 = math.exp %8 : vector<128x32xf32>
    %cst_4 = arith.constant dense<0.000000e+00> : vector<128xf32>
    %10 = vector.multi_reduction <add>, %9, %cst_4 [1] : vector<128x32xf32> to vector<128xf32>
    %11 = vector.shape_cast %10 : vector<128xf32> to vector<128x1xf32>
    %12 = math.log %11 : vector<128x1xf32>
    %13 = arith.addf %6, %12 : vector<128x1xf32>
    %14 = tpu.iota {dimensions = array<i32: 1>} : vector<128x32xi32>
    %15 = vector.broadcast %4 : vector<128x1xi32> to vector<128x32xi32>
    %16 = arith.cmpi eq, %14, %15 : vector<128x32xi32>
    %cst_5 = arith.constant 0.000000e+00 : f32
    %17 = vector.broadcast %cst_5 : f32 to vector<128x32xf32>
    %18 = arith.select %16, %3, %17 : vector<128x32xi1>, vector<128x32xf32>
    %cst_6 = arith.constant dense<0.000000e+00> : vector<128xf32>
    %19 = vector.multi_reduction <add>, %18, %cst_6 [1] : vector<128x32xf32> to vector<128xf32>
    %20 = vector.shape_cast %19 : vector<128xf32> to vector<128x1xf32>
    %cst_7 = arith.constant dense<0.000000e+00> : vector<128xf32>
    %21 = vector.multi_reduction <add>, %3, %cst_7 [1] : vector<128x32xf32> to vector<128xf32>
    %22 = vector.shape_cast %21 : vector<128xf32> to vector<128x1xf32>
    %23 = arith.subf %13, %20 : vector<128x1xf32>
    %cst_8 = arith.constant 0.899999976 : f32
    %24 = vector.broadcast %cst_8 : f32 to vector<128x1xf32>
    %25 = arith.mulf %24, %23 : vector<128x1xf32>
    %cst_9 = arith.constant 3.200000e+01 : f32
    %26 = vector.broadcast %cst_9 : f32 to vector<128x1xf32>
    %27 = arith.mulf %26, %13 : vector<128x1xf32>
    %28 = arith.subf %27, %22 : vector<128x1xf32>
    %cst_10 = arith.constant 3.125000e-03 : f32
    %29 = vector.broadcast %cst_10 : f32 to vector<128x1xf32>
    %30 = arith.mulf %29, %28 : vector<128x1xf32>
    %31 = arith.addf %25, %30 : vector<128x1xf32>
    %c128_i32 = arith.constant 128 : i32
    %32 = arith.muli %arg0, %c128_i32 : i32
    %33 = tpu.iota {dimensions = array<i32: 0>} : vector<128x1xi32>
    %34 = vector.broadcast %32 : i32 to vector<128x1xi32>
    %35 = arith.addi %34, %33 : vector<128x1xi32>
    %c128_i32_11 = arith.constant 128 : i32
    %36 = vector.broadcast %c128_i32_11 : i32 to vector<128x1xi32>
    %37 = arith.cmpi slt, %35, %36 : vector<128x1xi32>
    %38 = arith.extui %37 : vector<128x1xi1> to vector<128x1xi32>
    %39 = arith.sitofp %38 : vector<128x1xi32> to vector<128x1xf32>
    %c0_12 = arith.constant 0 : index
    %c0_13 = arith.constant 0 : index
    %40 = vector.load %arg4[%c0_12, %c0_13] : memref<128x1xf32, #tpu.memory_space<vmem>>, vector<128x1xf32>
    %41 = arith.mulf %31, %39 : vector<128x1xf32>
    %42 = arith.addf %40, %41 : vector<128x1xf32>
    %c0_14 = arith.constant 0 : index
    %c0_15 = arith.constant 0 : index
    %43 = vector.load %arg4[%c0_14, %c0_15] : memref<128x1xf32, #tpu.memory_space<vmem>>, vector<128x1xf32>
    tpu.vector_store %arg4[%c0_14, %c0_15], %42 {strides = array<i32>} : memref<128x1xf32, #tpu.memory_space<vmem>>, vector<128x1xf32>,
    %c0_i32_16 = arith.constant 0 : i32
    %44 = arith.cmpi eq, %arg0, %c0_i32_16 : i32
    %45 = arith.extui %44 : i1 to i32
    %c0_i32_17 = arith.constant 0 : i32
    %46 = arith.cmpi ne, %45, %c0_i32_17 : i32
    scf.if %46 {
      %c0_18 = arith.constant 0 : index
      %c0_19 = arith.constant 0 : index
      %47 = vector.load %arg4[%c0_18, %c0_19] : memref<128x1xf32, #tpu.memory_space<vmem>>, vector<128x1xf32>
      %48 = vector.shape_cast %47 : vector<128x1xf32> to vector<1x128x1xf32>
      %cst_20 = arith.constant dense<0.000000e+00> : vector<1xf32>
      %49 = vector.multi_reduction <add>, %48, %cst_20 [1, 2] : vector<1x128x1xf32> to vector<1xf32>
      %50 = vector.shape_cast %49 : vector<1xf32> to vector<1x1x1xf32>
      %51 = vector.extract %50[0, 0, 0] : f32 from vector<1x1x1xf32>
      %cst_21 = arith.constant 1.280000e+02 : f32
      %52 = arith.divf %51, %cst_21 : f32
      %c0_22 = arith.constant 0 : index
      %c0_23 = arith.constant 0 : index
      %53 = memref.load %arg3[%c0_22, %c0_23] : memref<1x1xf32, #tpu.memory_space<smem>>
      memref.store %52, %arg3[%c0_22, %c0_23] : memref<1x1xf32, #tpu.memory_space<smem>>
    } else {
    }
    return
  }
  func.func @transform_0(%arg0: i32) -> (i32, i32) {
    %c0_i32 = arith.constant 0 : i32
    %c0_i32_0 = arith.constant 0 : i32
    return %arg0, %c0_i32 : i32, i32
  }
  func.func @transform_1(%arg0: i32) -> (i32, i32) {
    %c0_i32 = arith.constant 0 : i32
    %c0_i32_0 = arith.constant 0 : i32
    return %arg0, %c0_i32 : i32, i32
  }
  func.func @transform_2(%arg0: i32) -> (i32, i32) {
    %c0_i32 = arith.constant 0 : i32
    %c0_i32_0 = arith.constant 0 : i32
    %c0_i32_1 = arith.constant 0 : i32
    return %c0_i32, %c0_i32_0 : i32, i32
  }
}

</mosaic_0001>

<llo_original>
// kernel: tpu_custom_call.1
$region0: #{tpu_custom_call.1}
  #allocation0 [shape = 'u32[]', space=smem, size = 0x4, offset = 0x4, fixed_abs, tag = 'smem constant byte address 0x4 - core index']
  #allocation1 [shape = 'u32[144,128]{1,0:T(1,128)}', space=vmem, size = 0x12000, scoped, tag = 'internal scratch']
  #allocation2 [shape = 'f32[128,1]{1,0:T(8,128)}', space=vmem, size = 0x10000, scoped, tag = 'scratch operand']
  %s0 = inlined_call_operand.vmem [shape: f32[128,32], index: 0, kind: input, shape index: {}]
  %s1 = inlined_call_operand.vmem [shape: s32[128,1], index: 1, kind: input, shape index: {}]
  %s2 = inlined_call_operand.hbm [shape: f32[1,1], index: 2, kind: output, shape index: {}]
  %s3 = sld [smem:[#allocation0]]
  $region26: #{tpu_custom_call.1} parent=0
    _
  %s5 = ssub.s32 1, %s3
  %s6 = scalar_select 0, %s5, %s3
  $region1: #{tpu_custom_call.1} parent=0
    #allocation3 [shape = 'u8[512]{0}', space=smem, size = 0x200, scoped, tag = 'output window, operand 0, single buffered']
    #allocation4 [shape = 's32[1]{0}', space=sflag, size = 0x4, scoped, tag = 'scoped memory for tpu_custom_call.1']
    %7 = vsyncpa [#allocation4], 0
    // Predicated region
    $region2: #{tpu_custom_call.1} parent=1 // pred_check
      _
    $region3: #{tpu_custom_call.1} parent=1 // pred_check_branch
      %9 = sbr.rel (0) target = $region5
    $region4: #{tpu_custom_call.1} parent=1 // pred_region
      _
    $region5: #{tpu_custom_call.1} parent=1 // pred_fallthru
      _
    // Predicated region
    $region6: #{tpu_custom_call.1} parent=1 // pred_check
      _
    $region7: #{tpu_custom_call.1} parent=1 // pred_check_branch
      %11 = sbr.rel (0) target = $region9
    $region8: #{tpu_custom_call.1} parent=1 // pred_region
      _
    $region9: #{tpu_custom_call.1} parent=1 // pred_fallthru
      _
    %p12 = scmp.eq.s32.totalorder 0, 0
    // Predicated region
    $region10: #{tpu_custom_call.1} parent=1 // pred_check
      %p13 = pneg %p12
    $region11: #{tpu_custom_call.1} parent=1 // pred_check_branch
      %15 = sbr.rel (%p13) target = $region13
    $region12: #{tpu_custom_call.1} parent=1 // pred_region
      %vm16 = vcmask 7168
      %17 = vst.msk [vmem:[#allocation2] sm:$0xff] %vm16, 0.0
      %18 = vst.msk [vmem:[#allocation2 + $0x8] sm:$0xff] %vm16, 0.0
      %19 = vst.msk [vmem:[#allocation2 + $0x10] sm:$0xff] %vm16, 0.0
      %20 = vst.msk [vmem:[#allocation2 + $0x18] sm:$0xff] %vm16, 0.0
      %21 = vst.msk [vmem:[#allocation2 + $0x20] sm:$0xff] %vm16, 0.0
      %22 = vst.msk [vmem:[#allocation2 + $0x28] sm:$0xff] %vm16, 0.0
      %23 = vst.msk [vmem:[#allocation2 + $0x30] sm:$0xff] %vm16, 0.0
      %24 = vst.msk [vmem:[#allocation2 + $0x38] sm:$0xff] %vm16, 0.0
      %25 = vst.msk [vmem:[#allocation2 + $0x40] sm:$0xff] %vm16, 0.0
      %26 = vst.msk [vmem:[#allocation2 + $0x48] sm:$0xff] %vm16, 0.0
      %27 = vst.msk [vmem:[#allocation2 + $0x50] sm:$0xff] %vm16, 0.0
      %28 = vst.msk [vmem:[#allocation2 + $0x58] sm:$0xff] %vm16, 0.0
      %29 = vst.msk [vmem:[#allocation2 + $0x60] sm:$0xff] %vm16, 0.0
      %30 = vst.msk [vmem:[#allocation2 + $0x68] sm:$0xff] %vm16, 0.0
      %31 = vst.msk [vmem:[#allocation2 + $0x70] sm:$0xff] %vm16, 0.0
      %32 = vst.msk [vmem:[#allocation2 + $0x78] sm:$0xff] %vm16, 0.0
    $region13: #{tpu_custom_call.1} parent=1 // pred_fallthru
      _
    %v33 = vld [vmem:[%s0] sm:$0xff]
    %v34 = vld [vmem:[%s0 + $0x8] sm:$0xff]
    %v35 = vld [vmem:[%s0 + $0x10] sm:$0xff]
    %v36 = vld [vmem:[%s0 + $0x18] sm:$0xff]
    %v37 = vld [vmem:[%s0 + $0x20] sm:$0xff]
    %v38 = vld [vmem:[%s0 + $0x28] sm:$0xff]
    %v39 = vld [vmem:[%s0 + $0x30] sm:$0xff]
    %v40 = vld [vmem:[%s0 + $0x38] sm:$0xff]
    %v41 = vld [vmem:[%s0 + $0x40] sm:$0xff]
    %v42 = vld [vmem:[%s0 + $0x48] sm:$0xff]
    %v43 = vld [vmem:[%s0 + $0x50] sm:$0xff]
    %v44 = vld [vmem:[%s0 + $0x58] sm:$0xff]
    %v45 = vld [vmem:[%s0 + $0x60] sm:$0xff]
    %v46 = vld [vmem:[%s0 + $0x68] sm:$0xff]
    %v47 = vld [vmem:[%s0 + $0x70] sm:$0xff]
    %v48 = vld [vmem:[%s0 + $0x78] sm:$0xff]
    %v49 = vld [vmem:[%s1] sm:$0xff]
    %v50 = vld [vmem:[%s1 + $0x8] sm:$0xff]
    %v51 = vld [vmem:[%s1 + $0x10] sm:$0xff]
    %v52 = vld [vmem:[%s1 + $0x18] sm:$0xff]
    %v53 = vld [vmem:[%s1 + $0x20] sm:$0xff]
    %v54 = vld [vmem:[%s1 + $0x28] sm:$0xff]
    %v55 = vld [vmem:[%s1 + $0x30] sm:$0xff]
    %v56 = vld [vmem:[%s1 + $0x38] sm:$0xff]
    %v57 = vld [vmem:[%s1 + $0x40] sm:$0xff]
    %v58 = vld [vmem:[%s1 + $0x48] sm:$0xff]
    %v59 = vld [vmem:[%s1 + $0x50] sm:$0xff]
    %v60 = vld [vmem:[%s1 + $0x58] sm:$0xff]
    %v61 = vld [vmem:[%s1 + $0x60] sm:$0xff]
    %v62 = vld [vmem:[%s1 + $0x68] sm:$0xff]
    %v63 = vld [vmem:[%s1 + $0x70] sm:$0xff]
    %v64 = vld [vmem:[%s1 + $0x78] sm:$0xff]
    %vm65 = vcmask 261120
    %v66 = vsel %vm65, %v33, -inf
    %67 = vmax.xlane.f32.xlu0 %v66
    %v68 = vpop.xlane.xlu0 %67
    %v69 = vsel %vm65, %v34, -inf
    %70 = vmax.xlane.f32.xlu0 %v69
    %v71 = vpop.xlane.xlu0 %70
    %v72 = vsel %vm65, %v35, -inf
    %73 = vmax.xlane.f32.xlu0 %v72
    %v74 = vpop.xlane.xlu0 %73
    %v75 = vsel %vm65, %v36, -inf
    %76 = vmax.xlane.f32.xlu0 %v75
    %v77 = vpop.xlane.xlu0 %76
    %v78 = vsel %vm65, %v37, -inf
    %79 = vmax.xlane.f32.xlu0 %v78
    %v80 = vpop.xlane.xlu0 %79
    %v81 = vsel %vm65, %v38, -inf
    %82 = vmax.xlane.f32.xlu0 %v81
    %v83 = vpop.xlane.xlu0 %82
    %v84 = vsel %vm65, %v39, -inf
    %85 = vmax.xlane.f32.xlu0 %v84
    %v86 = vpop.xlane.xlu0 %85
    %v87 = vsel %vm65, %v40, -inf
    %88 = vmax.xlane.f32.xlu0 %v87
    %v89 = vpop.xlane.xlu0 %88
    %v90 = vsel %vm65, %v41, -inf
    %91 = vmax.xlane.f32.xlu0 %v90
    %v92 = vpop.xlane.xlu0 %91
    %v93 = vsel %vm65, %v42, -inf
    %94 = vmax.xlane.f32.xlu0 %v93
    %v95 = vpop.xlane.xlu0 %94
    %v96 = vsel %vm65, %v43, -inf
    %97 = vmax.xlane.f32.xlu0 %v96
    %v98 = vpop.xlane.xlu0 %97
    %v99 = vsel %vm65, %v44, -inf
    %100 = vmax.xlane.f32.xlu0 %v99
    %v101 = vpop.xlane.xlu0 %100
    %v102 = vsel %vm65, %v45, -inf
    %103 = vmax.xlane.f32.xlu0 %v102
    %v104 = vpop.xlane.xlu0 %103
    %v105 = vsel %vm65, %v46, -inf
    %106 = vmax.xlane.f32.xlu0 %v105
    %v107 = vpop.xlane.xlu0 %106
    %v108 = vsel %vm65, %v47, -inf
    %109 = vmax.xlane.f32.xlu0 %v108
    %v110 = vpop.xlane.xlu0 %109
    %v111 = vsel %vm65, %v48, -inf
    %112 = vmax.xlane.f32.xlu0 %v111
    %v113 = vpop.xlane.xlu0 %112
    %v114 = vsub.f32 %v33, %v68
    %v115 = vsub.f32 %v34, %v71
    %v116 = vsub.f32 %v35, %v74
    %v117 = vsub.f32 %v36, %v77
    %v118 = vsub.f32 %v37, %v80
    %v119 = vsub.f32 %v38, %v83
    %v120 = vsub.f32 %v39, %v86
    %v121 = vsub.f32 %v40, %v89
    %v122 = vsub.f32 %v41, %v92
    %v123 = vsub.f32 %v42, %v95
    %v124 = vsub.f32 %v43, %v98
    %v125 = vsub.f32 %v44, %v101
    %v126 = vsub.f32 %v45, %v104
    %v127 = vsub.f32 %v46, %v107
    %v128 = vsub.f32 %v47, %v110
    %v129 = vsub.f32 %v48, %v113
    %v130 = vmul.f32 %v114, 1.442695
    %v131 = vpow.pop %v130
    %v132 = vmul.f32 %v115, 1.442695
    %v133 = vpow.pop %v132
    %v134 = vmul.f32 %v116, 1.442695
    %v135 = vpow.pop %v134
    %v136 = vmul.f32 %v117, 1.442695
    %v137 = vpow.pop %v136
    %v138 = vmul.f32 %v118, 1.442695
    %v139 = vpow.pop %v138
    %v140 = vmul.f32 %v119, 1.442695
    %v141 = vpow.pop %v140
    %v142 = vmul.f32 %v120, 1.442695
    %v143 = vpow.pop %v142
    %v144 = vmul.f32 %v121, 1.442695
    %v145 = vpow.pop %v144
    %v146 = vmul.f32 %v122, 1.442695
    %v147 = vpow.pop %v146
    %v148 = vmul.f32 %v123, 1.442695
    %v149 = vpow.pop %v148
    %v150 = vmul.f32 %v124, 1.442695
    %v151 = vpow.pop %v150
    %v152 = vmul.f32 %v125, 1.442695
    %v153 = vpow.pop %v152
    %v154 = vmul.f32 %v126, 1.442695
    %v155 = vpow.pop %v154
    %v156 = vmul.f32 %v127, 1.442695
    %v157 = vpow.pop %v156
    %v158 = vmul.f32 %v128, 1.442695
    %v159 = vpow.pop %v158
    %v160 = vmul.f32 %v129, 1.442695
    %v161 = vpow.pop %v160
    %v162 = vsel %vm65, %v131, 0.0
    %163 = vadd.xlane.f32.xlu0 %v162
    %v164 = vpop.xlane.xlu0 %163
    %v165 = vsel %vm65, %v133, 0.0
    %166 = vadd.xlane.f32.xlu0 %v165
    %v167 = vpop.xlane.xlu0 %166
    %v168 = vsel %vm65, %v135, 0.0
    %169 = vadd.xlane.f32.xlu0 %v168
    %v170 = vpop.xlane.xlu0 %169
    %v171 = vsel %vm65, %v137, 0.0
    %172 = vadd.xlane.f32.xlu0 %v171
    %v173 = vpop.xlane.xlu0 %172
    %v174 = vsel %vm65, %v139, 0.0
    %175 = vadd.xlane.f32.xlu0 %v174
    %v176 = vpop.xlane.xlu0 %175
    %v177 = vsel %vm65, %v141, 0.0
    %178 = vadd.xlane.f32.xlu0 %v177
    %v179 = vpop.xlane.xlu0 %178
    %v180 = vsel %vm65, %v143, 0.0
    %181 = vadd.xlane.f32.xlu0 %v180
    %v182 = vpop.xlane.xlu0 %181
    %v183 = vsel %vm65, %v145, 0.0
    %184 = vadd.xlane.f32.xlu0 %v183
    %v185 = vpop.xlane.xlu0 %184
    %v186 = vsel %vm65, %v147, 0.0
    %187 = vadd.xlane.f32.xlu0 %v186
    %v188 = vpop.xlane.xlu0 %187
    %v189 = vsel %vm65, %v149, 0.0
    %190 = vadd.xlane.f32.xlu0 %v189
    %v191 = vpop.xlane.xlu0 %190
    %v192 = vsel %vm65, %v151, 0.0
    %193 = vadd.xlane.f32.xlu0 %v192
    %v194 = vpop.xlane.xlu0 %193
    %v195 = vsel %vm65, %v153, 0.0
    %196 = vadd.xlane.f32.xlu0 %v195
    %v197 = vpop.xlane.xlu0 %196
    %v198 = vsel %vm65, %v155, 0.0
    %199 = vadd.xlane.f32.xlu0 %v198
    %v200 = vpop.xlane.xlu0 %199
    %v201 = vsel %vm65, %v157, 0.0
    %202 = vadd.xlane.f32.xlu0 %v201
    %v203 = vpop.xlane.xlu0 %202
    %v204 = vsel %vm65, %v159, 0.0
    %205 = vadd.xlane.f32.xlu0 %v204
    %v206 = vpop.xlane.xlu0 %205
    %v207 = vsel %vm65, %v161, 0.0
    %208 = vadd.xlane.f32.xlu0 %v207
    %v209 = vpop.xlane.xlu0 %208
    %v210 = vlog2.pop %v164
    %v211 = vmul.f32 %v210, 0.6931472
    %v212 = vlog2.pop %v167
    %v213 = vmul.f32 %v212, 0.6931472
    %v214 = vlog2.pop %v170
    %v215 = vmul.f32 %v214, 0.6931472
    %v216 = vlog2.pop %v173
    %v217 = vmul.f32 %v216, 0.6931472
    %v218 = vlog2.pop %v176
    %v219 = vmul.f32 %v218, 0.6931472
    %v220 = vlog2.pop %v179
    %v221 = vmul.f32 %v220, 0.6931472
    %v222 = vlog2.pop %v182
    %v223 = vmul.f32 %v222, 0.6931472
    %v224 = vlog2.pop %v185
    %v225 = vmul.f32 %v224, 0.6931472
    %v226 = vlog2.pop %v188
    %v227 = vmul.f32 %v226, 0.6931472
    %v228 = vlog2.pop %v191
    %v229 = vmul.f32 %v228, 0.6931472
    %v230 = vlog2.pop %v194
    %v231 = vmul.f32 %v230, 0.6931472
    %v232 = vlog2.pop %v197
    %v233 = vmul.f32 %v232, 0.6931472
    %v234 = vlog2.pop %v200
    %v235 = vmul.f32 %v234, 0.6931472
    %v236 = vlog2.pop %v203
    %v237 = vmul.f32 %v236, 0.6931472
    %v238 = vlog2.pop %v206
    %v239 = vmul.f32 %v238, 0.6931472
    %v240 = vlog2.pop %v209
    %v241 = vmul.f32 %v240, 0.6931472
    %v242 = vadd.f32 %v68, %v211
    %v243 = vadd.f32 %v71, %v213
    %v244 = vadd.f32 %v74, %v215
    %v245 = vadd.f32 %v77, %v217
    %v246 = vadd.f32 %v80, %v219
    %v247 = vadd.f32 %v83, %v221
    %v248 = vadd.f32 %v86, %v223
    %v249 = vadd.f32 %v89, %v225
    %v250 = vadd.f32 %v92, %v227
    %v251 = vadd.f32 %v95, %v229
    %v252 = vadd.f32 %v98, %v231
    %v253 = vadd.f32 %v101, %v233
    %v254 = vadd.f32 %v104, %v235
    %v255 = vadd.f32 %v107, %v237
    %v256 = vadd.f32 %v110, %v239
    %v257 = vadd.f32 %v113, %v241
    %v258 = vlaneseq
    %v259 = vand.u32 %v258, 127
    %260 = vset.pattern.permute.xlu0 0
    %261 = vperm.xlu0 %260, %v49
    %v262 = vpop.permute.xlu0 %261
    %263 = vset.pattern.permute.xlu0 0
    %264 = vperm.xlu0 %263, %v50
    %v265 = vpop.permute.xlu0 %264
    %266 = vset.pattern.permute.xlu0 0
    %267 = vperm.xlu0 %266, %v51
    %v268 = vpop.permute.xlu0 %267
    %269 = vset.pattern.permute.xlu0 0
    %270 = vperm.xlu0 %269, %v52
    %v271 = vpop.permute.xlu0 %270
    %272 = vset.pattern.permute.xlu0 0
    %273 = vperm.xlu0 %272, %v53
    %v274 = vpop.permute.xlu0 %273
    %275 = vset.pattern.permute.xlu0 0
    %276 = vperm.xlu0 %275, %v54
    %v277 = vpop.permute.xlu0 %276
    %278 = vset.pattern.permute.xlu0 0
    %279 = vperm.xlu0 %278, %v55
    %v280 = vpop.permute.xlu0 %279
    %281 = vset.pattern.permute.xlu0 0
    %282 = vperm.xlu0 %281, %v56
    %v283 = vpop.permute.xlu0 %282
    %284 = vset.pattern.permute.xlu0 0
    %285 = vperm.xlu0 %284, %v57
    %v286 = vpop.permute.xlu0 %285
    %287 = vset.pattern.permute.xlu0 0
    %288 = vperm.xlu0 %287, %v58
    %v289 = vpop.permute.xlu0 %288
    %290 = vset.pattern.permute.xlu0 0
    %291 = vperm.xlu0 %290, %v59
    %v292 = vpop.permute.xlu0 %291
    %293 = vset.pattern.permute.xlu0 0
    %294 = vperm.xlu0 %293, %v60
    %v295 = vpop.permute.xlu0 %294
    %296 = vset.pattern.permute.xlu0 0
    %297 = vperm.xlu0 %296, %v61
    %v298 = vpop.permute.xlu0 %297
    %299 = vset.pattern.permute.xlu0 0
    %300 = vperm.xlu0 %299, %v62
    %v301 = vpop.permute.xlu0 %300
    %302 = vset.pattern.permute.xlu0 0
    %303 = vperm.xlu0 %302, %v63
    %v304 = vpop.permute.xlu0 %303
    %305 = vset.pattern.permute.xlu0 0
    %306 = vperm.xlu0 %305, %v64
    %v307 = vpop.permute.xlu0 %306
    %vm308 = vcmp.eq.s32.totalorder %v259, %v262
    %vm309 = vcmp.eq.s32.totalorder %v259, %v265
    %vm310 = vcmp.eq.s32.totalorder %v259, %v268
    %vm311 = vcmp.eq.s32.totalorder %v259, %v271
    %vm312 = vcmp.eq.s32.totalorder %v259, %v274
    %vm313 = vcmp.eq.s32.totalorder %v259, %v277
    %vm314 = vcmp.eq.s32.totalorder %v259, %v280
    %vm315 = vcmp.eq.s32.totalorder %v259, %v283
    %vm316 = vcmp.eq.s32.totalorder %v259, %v286
    %vm317 = vcmp.eq.s32.totalorder %v259, %v289
    %vm318 = vcmp.eq.s32.totalorder %v259, %v292
    %vm319 = vcmp.eq.s32.totalorder %v259, %v295
    %vm320 = vcmp.eq.s32.totalorder %v259, %v298
    %vm321 = vcmp.eq.s32.totalorder %v259, %v301
    %vm322 = vcmp.eq.s32.totalorder %v259, %v304
    %vm323 = vcmp.eq.s32.totalorder %v259, %v307
    %v324 = vsel %vm308, %v33, 0.0
    %v325 = vsel %vm309, %v34, 0.0
    %v326 = vsel %vm310, %v35, 0.0
    %v327 = vsel %vm311, %v36, 0.0
    %v328 = vsel %vm312, %v37, 0.0
    %v329 = vsel %vm313, %v38, 0.0
    %v330 = vsel %vm314, %v39, 0.0
    %v331 = vsel %vm315, %v40, 0.0
    %v332 = vsel %vm316, %v41, 0.0
    %v333 = vsel %vm317, %v42, 0.0
    %v334 = vsel %vm318, %v43, 0.0
    %v335 = vsel %vm319, %v44, 0.0
    %v336 = vsel %vm320, %v45, 0.0
    %v337 = vsel %vm321, %v46, 0.0
    %v338 = vsel %vm322, %v47, 0.0
    %v339 = vsel %vm323, %v48, 0.0
    %v340 = vsel %vm65, %v324, 0.0
    %341 = vadd.xlane.f32.xlu0 %v340
    %v342 = vpop.xlane.xlu0 %341
    %v343 = vsel %vm65, %v325, 0.0
    %344 = vadd.xlane.f32.xlu0 %v343
    %v345 = vpop.xlane.xlu0 %344
    %v346 = vsel %vm65, %v326, 0.0
    %347 = vadd.xlane.f32.xlu0 %v346
    %v348 = vpop.xlane.xlu0 %347
    %v349 = vsel %vm65, %v327, 0.0
    %350 = vadd.xlane.f32.xlu0 %v349
    %v351 = vpop.xlane.xlu0 %350
    %v352 = vsel %vm65, %v328, 0.0
    %353 = vadd.xlane.f32.xlu0 %v352
    %v354 = vpop.xlane.xlu0 %353
    %v355 = vsel %vm65, %v329, 0.0
    %356 = vadd.xlane.f32.xlu0 %v355
    %v357 = vpop.xlane.xlu0 %356
    %v358 = vsel %vm65, %v330, 0.0
    %359 = vadd.xlane.f32.xlu0 %v358
    %v360 = vpop.xlane.xlu0 %359
    %v361 = vsel %vm65, %v331, 0.0
    %362 = vadd.xlane.f32.xlu0 %v361
    %v363 = vpop.xlane.xlu0 %362
    %v364 = vsel %vm65, %v332, 0.0
    %365 = vadd.xlane.f32.xlu0 %v364
    %v366 = vpop.xlane.xlu0 %365
    %v367 = vsel %vm65, %v333, 0.0
    %368 = vadd.xlane.f32.xlu0 %v367
    %v369 = vpop.xlane.xlu0 %368
    %v370 = vsel %vm65, %v334, 0.0
    %371 = vadd.xlane.f32.xlu0 %v370
    %v372 = vpop.xlane.xlu0 %371
    %v373 = vsel %vm65, %v335, 0.0
    %374 = vadd.xlane.f32.xlu0 %v373
    %v375 = vpop.xlane.xlu0 %374
    %v376 = vsel %vm65, %v336, 0.0
    %377 = vadd.xlane.f32.xlu0 %v376
    %v378 = vpop.xlane.xlu0 %377
    %v379 = vsel %vm65, %v337, 0.0
    %380 = vadd.xlane.f32.xlu0 %v379
    %v381 = vpop.xlane.xlu0 %380
    %v382 = vsel %vm65, %v338, 0.0
    %383 = vadd.xlane.f32.xlu0 %v382
    %v384 = vpop.xlane.xlu0 %383
    %v385 = vsel %vm65, %v339, 0.0
    %386 = vadd.xlane.f32.xlu0 %v385
    %v387 = vpop.xlane.xlu0 %386
    %v388 = vsel %vm65, %v33, 0.0
    %389 = vadd.xlane.f32.xlu0 %v388
    %v390 = vpop.xlane.xlu0 %389
    %v391 = vsel %vm65, %v34, 0.0
    %392 = vadd.xlane.f32.xlu0 %v391
    %v393 = vpop.xlane.xlu0 %392
    %v394 = vsel %vm65, %v35, 0.0
    %395 = vadd.xlane.f32.xlu0 %v394
    %v396 = vpop.xlane.xlu0 %395
    %v397 = vsel %vm65, %v36, 0.0
    %398 = vadd.xlane.f32.xlu0 %v397
    %v399 = vpop.xlane.xlu0 %398
    %v400 = vsel %vm65, %v37, 0.0
    %401 = vadd.xlane.f32.xlu0 %v400
    %v402 = vpop.xlane.xlu0 %401
    %v403 = vsel %vm65, %v38, 0.0
    %404 = vadd.xlane.f32.xlu0 %v403
    %v405 = vpop.xlane.xlu0 %404
    %v406 = vsel %vm65, %v39, 0.0
    %407 = vadd.xlane.f32.xlu0 %v406
    %v408 = vpop.xlane.xlu0 %407
    %v409 = vsel %vm65, %v40, 0.0
    %410 = vadd.xlane.f32.xlu0 %v409
    %v411 = vpop.xlane.xlu0 %410
    %v412 = vsel %vm65, %v41, 0.0
    %413 = vadd.xlane.f32.xlu0 %v412
    %v414 = vpop.xlane.xlu0 %413
    %v415 = vsel %vm65, %v42, 0.0
    %416 = vadd.xlane.f32.xlu0 %v415
    %v417 = vpop.xlane.xlu0 %416
    %v418 = vsel %vm65, %v43, 0.0
    %419 = vadd.xlane.f32.xlu0 %v418
    %v420 = vpop.xlane.xlu0 %419
    %v421 = vsel %vm65, %v44, 0.0
    %422 = vadd.xlane.f32.xlu0 %v421
    %v423 = vpop.xlane.xlu0 %422
    %v424 = vsel %vm65, %v45, 0.0
    %425 = vadd.xlane.f32.xlu0 %v424
    %v426 = vpop.xlane.xlu0 %425
    %v427 = vsel %vm65, %v46, 0.0
    %428 = vadd.xlane.f32.xlu0 %v427
    %v429 = vpop.xlane.xlu0 %428
    %v430 = vsel %vm65, %v47, 0.0
    %431 = vadd.xlane.f32.xlu0 %v430
    %v432 = vpop.xlane.xlu0 %431
    %v433 = vsel %vm65, %v48, 0.0
    %434 = vadd.xlane.f32.xlu0 %v433
    %v435 = vpop.xlane.xlu0 %434
    %v436 = vsub.f32 %v242, %v342
    %v437 = vsub.f32 %v243, %v345
    %v438 = vsub.f32 %v244, %v348
    %v439 = vsub.f32 %v245, %v351
    %v440 = vsub.f32 %v246, %v354
    %v441 = vsub.f32 %v247, %v357
    %v442 = vsub.f32 %v248, %v360
    %v443 = vsub.f32 %v249, %v363
    %v444 = vsub.f32 %v250, %v366
    %v445 = vsub.f32 %v251, %v369
    %v446 = vsub.f32 %v252, %v372
    %v447 = vsub.f32 %v253, %v375
    %v448 = vsub.f32 %v254, %v378
    %v449 = vsub.f32 %v255, %v381
    %v450 = vsub.f32 %v256, %v384
    %v451 = vsub.f32 %v257, %v387
    %v452 = vmul.f32 %v436, 0.9
    %v453 = vmul.f32 %v437, 0.9
    %v454 = vmul.f32 %v438, 0.9
    %v455 = vmul.f32 %v439, 0.9
    %v456 = vmul.f32 %v440, 0.9
    %v457 = vmul.f32 %v441, 0.9
    %v458 = vmul.f32 %v442, 0.9
    %v459 = vmul.f32 %v443, 0.9
    %v460 = vmul.f32 %v444, 0.9
    %v461 = vmul.f32 %v445, 0.9
    %v462 = vmul.f32 %v446, 0.9
    %v463 = vmul.f32 %v447, 0.9
    %v464 = vmul.f32 %v448, 0.9
    %v465 = vmul.f32 %v449, 0.9
    %v466 = vmul.f32 %v450, 0.9
    %v467 = vmul.f32 %v451, 0.9
    %v468 = vmul.f32 %v242, 32.0
    %v469 = vmul.f32 %v243, 32.0
    %v470 = vmul.f32 %v244, 32.0
    %v471 = vmul.f32 %v245, 32.0
    %v472 = vmul.f32 %v246, 32.0
    %v473 = vmul.f32 %v247, 32.0
    %v474 = vmul.f32 %v248, 32.0
    %v475 = vmul.f32 %v249, 32.0
    %v476 = vmul.f32 %v250, 32.0
    %v477 = vmul.f32 %v251, 32.0
    %v478 = vmul.f32 %v252, 32.0
    %v479 = vmul.f32 %v253, 32.0
    %v480 = vmul.f32 %v254, 32.0
    %v481 = vmul.f32 %v255, 32.0
    %v482 = vmul.f32 %v256, 32.0
    %v483 = vmul.f32 %v257, 32.0
    %v484 = vsub.f32 %v468, %v390
    %v485 = vsub.f32 %v469, %v393
    %v486 = vsub.f32 %v470, %v396
    %v487 = vsub.f32 %v471, %v399
    %v488 = vsub.f32 %v472, %v402
    %v489 = vsub.f32 %v473, %v405
    %v490 = vsub.f32 %v474, %v408
    %v491 = vsub.f32 %v475, %v411
    %v492 = vsub.f32 %v476, %v414
    %v493 = vsub.f32 %v477, %v417
    %v494 = vsub.f32 %v478, %v420
    %v495 = vsub.f32 %v479, %v423
    %v496 = vsub.f32 %v480, %v426
    %v497 = vsub.f32 %v481, %v429
    %v498 = vsub.f32 %v482, %v432
    %v499 = vsub.f32 %v483, %v435
    %v500 = vmul.f32 %v484, 0.003125
    %v501 = vmul.f32 %v485, 0.003125
    %v502 = vmul.f32 %v486, 0.003125
    %v503 = vmul.f32 %v487, 0.003125
    %v504 = vmul.f32 %v488, 0.003125
    %v505 = vmul.f32 %v489, 0.003125
    %v506 = vmul.f32 %v490, 0.003125
    %v507 = vmul.f32 %v491, 0.003125
    %v508 = vmul.f32 %v492, 0.003125
    %v509 = vmul.f32 %v493, 0.003125
    %v510 = vmul.f32 %v494, 0.003125
    %v511 = vmul.f32 %v495, 0.003125
    %v512 = vmul.f32 %v496, 0.003125
    %v513 = vmul.f32 %v497, 0.003125
    %v514 = vmul.f32 %v498, 0.003125
    %v515 = vmul.f32 %v499, 0.003125
    %v516 = vadd.f32 %v452, %v500
    %v517 = vadd.f32 %v453, %v501
    %v518 = vadd.f32 %v454, %v502
    %v519 = vadd.f32 %v455, %v503
    %v520 = vadd.f32 %v456, %v504
    %v521 = vadd.f32 %v457, %v505
    %v522 = vadd.f32 %v458, %v506
    %v523 = vadd.f32 %v459, %v507
    %v524 = vadd.f32 %v460, %v508
    %v525 = vadd.f32 %v461, %v509
    %v526 = vadd.f32 %v462, %v510
    %v527 = vadd.f32 %v463, %v511
    %v528 = vadd.f32 %v464, %v512
    %v529 = vadd.f32 %v465, %v513
    %v530 = vadd.f32 %v466, %v514
    %v531 = vadd.f32 %v467, %v515
    %s532 = smul.u32 0, 128
    %v533 = vlaneseq
    %v534 = vshrl.u32 %v533, 7
    %v535 = vadd.s32 %v534, 8
    %v536 = vadd.s32 %v534, 16
    %v537 = vadd.s32 %v534, 24
    %v538 = vadd.s32 %v534, 32
    %v539 = vadd.s32 %v534, 40
    %v540 = vadd.s32 %v534, 48
    %v541 = vadd.s32 %v534, 56
    %v542 = vadd.s32 %v534, 64
    %v543 = vadd.s32 %v534, 72
    %v544 = vadd.s32 %v534, 80
    %v545 = vadd.s32 %v534, 88
    %v546 = vadd.s32 %v534, 96
    %v547 = vadd.s32 %v534, 104
    %v548 = vadd.s32 %v534, 112
    %v549 = vadd.s32 %v534, 120
    %v550 = vstv %s532
    %v551 = vadd.s32 %v550, %v534
    %v552 = vadd.s32 %v550, %v535
    %v553 = vadd.s32 %v550, %v536
    %v554 = vadd.s32 %v550, %v537
    %v555 = vadd.s32 %v550, %v538
    %v556 = vadd.s32 %v550, %v539
    %v557 = vadd.s32 %v550, %v540
    %v558 = vadd.s32 %v550, %v541
    %v559 = vadd.s32 %v550, %v542
    %v560 = vadd.s32 %v550, %v543
    %v561 = vadd.s32 %v550, %v544
    %v562 = vadd.s32 %v550, %v545
    %v563 = vadd.s32 %v550, %v546
    %v564 = vadd.s32 %v550, %v547
    %v565 = vadd.s32 %v550, %v548
    %v566 = vadd.s32 %v550, %v549
    %vm567 = vcmp.lt.s32.totalorder %v551, 128
    %vm568 = vcmp.lt.s32.totalorder %v552, 128
    %vm569 = vcmp.lt.s32.totalorder %v553, 128
    %vm570 = vcmp.lt.s32.totalorder %v554, 128
    %vm571 = vcmp.lt.s32.totalorder %v555, 128
    %vm572 = vcmp.lt.s32.totalorder %v556, 128
    %vm573 = vcmp.lt.s32.totalorder %v557, 128
    %vm574 = vcmp.lt.s32.totalorder %v558, 128
    %vm575 = vcmp.lt.s32.totalorder %v559, 128
    %vm576 = vcmp.lt.s32.totalorder %v560, 128
    %vm577 = vcmp.lt.s32.totalorder %v561, 128
    %vm578 = vcmp.lt.s32.totalorder %v562, 128
    %vm579 = vcmp.lt.s32.totalorder %v563, 128
    %vm580 = vcmp.lt.s32.totalorder %v564, 128
    %vm581 = vcmp.lt.s32.totalorder %v565, 128
    %vm582 = vcmp.lt.s32.totalorder %v566, 128
    %v583 = vsel %vm567, 1, 0
    %v584 = vsel %vm568, 1, 0
    %v585 = vsel %vm569, 1, 0
    %v586 = vsel %vm570, 1, 0
    %v587 = vsel %vm571, 1, 0
    %v588 = vsel %vm572, 1, 0
    %v589 = vsel %vm573, 1, 0
    %v590 = vsel %vm574, 1, 0
    %v591 = vsel %vm575, 1, 0
    %v592 = vsel %vm576, 1, 0
    %v593 = vsel %vm577, 1, 0
    %v594 = vsel %vm578, 1, 0
    %v595 = vsel %vm579, 1, 0
    %v596 = vsel %vm580, 1, 0
    %v597 = vsel %vm581, 1, 0
    %v598 = vsel %vm582, 1, 0
    %v599 = vcvt.s32.f32 %v583
    %v600 = vcvt.s32.f32 %v584
    %v601 = vcvt.s32.f32 %v585
    %v602 = vcvt.s32.f32 %v586
    %v603 = vcvt.s32.f32 %v587
    %v604 = vcvt.s32.f32 %v588
    %v605 = vcvt.s32.f32 %v589
    %v606 = vcvt.s32.f32 %v590
    %v607 = vcvt.s32.f32 %v591
    %v608 = vcvt.s32.f32 %v592
    %v609 = vcvt.s32.f32 %v593
    %v610 = vcvt.s32.f32 %v594
    %v611 = vcvt.s32.f32 %v595
    %v612 = vcvt.s32.f32 %v596
    %v613 = vcvt.s32.f32 %v597
    %v614 = vcvt.s32.f32 %v598
    %v615 = vld [vmem:[#allocation2] sm:$0xff]
    %v616 = vld [vmem:[#allocation2 + $0x8] sm:$0xff]
    %v617 = vld [vmem:[#allocation2 + $0x10] sm:$0xff]
    %v618 = vld [vmem:[#allocation2 + $0x18] sm:$0xff]
    %v619 = vld [vmem:[#allocation2 + $0x20] sm:$0xff]
    %v620 = vld [vmem:[#allocation2 + $0x28] sm:$0xff]
    %v621 = vld [vmem:[#allocation2 + $0x30] sm:$0xff]
    %v622 = vld [vmem:[#allocation2 + $0x38] sm:$0xff]
    %v623 = vld [vmem:[#allocation2 + $0x40] sm:$0xff]
    %v624 = vld [vmem:[#allocation2 + $0x48] sm:$0xff]
    %v625 = vld [vmem:[#allocation2 + $0x50] sm:$0xff]
    %v626 = vld [vmem:[#allocation2 + $0x58] sm:$0xff]
    %v627 = vld [vmem:[#allocation2 + $0x60] sm:$0xff]
    %v628 = vld [vmem:[#allocation2 + $0x68] sm:$0xff]
    %v629 = vld [vmem:[#allocation2 + $0x70] sm:$0xff]
    %v630 = vld [vmem:[#allocation2 + $0x78] sm:$0xff]
    %v631 = vmul.f32 %v516, %v599
    %v632 = vmul.f32 %v517, %v600
    %v633 = vmul.f32 %v518, %v601
    %v634 = vmul.f32 %v519, %v602
    %v635 = vmul.f32 %v520, %v603
    %v636 = vmul.f32 %v521, %v604
    %v637 = vmul.f32 %v522, %v605
    %v638 = vmul.f32 %v523, %v606
    %v639 = vmul.f32 %v524, %v607
    %v640 = vmul.f32 %v525, %v608
    %v641 = vmul.f32 %v526, %v609
    %v642 = vmul.f32 %v527, %v610
    %v643 = vmul.f32 %v528, %v611
    %v644 = vmul.f32 %v529, %v612
    %v645 = vmul.f32 %v530, %v613
    %v646 = vmul.f32 %v531, %v614
    %v647 = vadd.f32 %v615, %v631
    %v648 = vadd.f32 %v616, %v632
    %v649 = vadd.f32 %v617, %v633
    %v650 = vadd.f32 %v618, %v634
    %v651 = vadd.f32 %v619, %v635
    %v652 = vadd.f32 %v620, %v636
    %v653 = vadd.f32 %v621, %v637
    %v654 = vadd.f32 %v622, %v638
    %v655 = vadd.f32 %v623, %v639
    %v656 = vadd.f32 %v624, %v640
    %v657 = vadd.f32 %v625, %v641
    %v658 = vadd.f32 %v626, %v642
    %v659 = vadd.f32 %v627, %v643
    %v660 = vadd.f32 %v628, %v644
    %v661 = vadd.f32 %v629, %v645
    %v662 = vadd.f32 %v630, %v646
    %vm663 = vcmask 7168
    %664 = vst.msk [vmem:[#allocation2] sm:$0xff] %vm663, %v647
    %665 = vst.msk [vmem:[#allocation2 + $0x8] sm:$0xff] %vm663, %v648
    %666 = vst.msk [vmem:[#allocation2 + $0x10] sm:$0xff] %vm663, %v649
    %667 = vst.msk [vmem:[#allocation2 + $0x18] sm:$0xff] %vm663, %v650
    %668 = vst.msk [vmem:[#allocation2 + $0x20] sm:$0xff] %vm663, %v651
    %669 = vst.msk [vmem:[#allocation2 + $0x28] sm:$0xff] %vm663, %v652
    %670 = vst.msk [vmem:[#allocation2 + $0x30] sm:$0xff] %vm663, %v653
    %671 = vst.msk [vmem:[#allocation2 + $0x38] sm:$0xff] %vm663, %v654
    %672 = vst.msk [vmem:[#allocation2 + $0x40] sm:$0xff] %vm663, %v655
    %673 = vst.msk [vmem:[#allocation2 + $0x48] sm:$0xff] %vm663, %v656
    %674 = vst.msk [vmem:[#allocation2 + $0x50] sm:$0xff] %vm663, %v657
    %675 = vst.msk [vmem:[#allocation2 + $0x58] sm:$0xff] %vm663, %v658
    %676 = vst.msk [vmem:[#allocation2 + $0x60] sm:$0xff] %vm663, %v659
    %677 = vst.msk [vmem:[#allocation2 + $0x68] sm:$0xff] %vm663, %v660
    %678 = vst.msk [vmem:[#allocation2 + $0x70] sm:$0xff] %vm663, %v661
    %679 = vst.msk [vmem:[#allocation2 + $0x78] sm:$0xff] %vm663, %v662
    // Predicated region
    $region14: #{tpu_custom_call.1} parent=1 // pred_check
      %p680 = pneg %p12
    $region15: #{tpu_custom_call.1} parent=1 // pred_check_branch
      %682 = sbr.rel (%p680) target = $region17
    $region16: #{tpu_custom_call.1} parent=1 // pred_region
      %v683 = vld [vmem:[#allocation2] sm:$0xff]
      %v684 = vld [vmem:[#allocation2 + $0x8] sm:$0xff]
      %v685 = vld [vmem:[#allocation2 + $0x10] sm:$0xff]
      %v686 = vld [vmem:[#allocation2 + $0x18] sm:$0xff]
      %v687 = vld [vmem:[#allocation2 + $0x20] sm:$0xff]
      %v688 = vld [vmem:[#allocation2 + $0x28] sm:$0xff]
      %v689 = vld [vmem:[#allocation2 + $0x30] sm:$0xff]
      %v690 = vld [vmem:[#allocation2 + $0x38] sm:$0xff]
      %v691 = vld [vmem:[#allocation2 + $0x40] sm:$0xff]
      %v692 = vld [vmem:[#allocation2 + $0x48] sm:$0xff]
      %v693 = vld [vmem:[#allocation2 + $0x50] sm:$0xff]
      %v694 = vld [vmem:[#allocation2 + $0x58] sm:$0xff]
      %v695 = vld [vmem:[#allocation2 + $0x60] sm:$0xff]
      %v696 = vld [vmem:[#allocation2 + $0x68] sm:$0xff]
      %v697 = vld [vmem:[#allocation2 + $0x70] sm:$0xff]
      %v698 = vld [vmem:[#allocation2 + $0x78] sm:$0xff]
      %v699 = vsel %vm663, %v683, 0.0
      %v700 = vsel %vm663, %v684, 0.0
      %v701 = vadd.f32 %v699, %v700
      %v702 = vsel %vm663, %v685, 0.0
      %v703 = vadd.f32 %v701, %v702
      %v704 = vsel %vm663, %v686, 0.0
      %v705 = vadd.f32 %v703, %v704
      %v706 = vsel %vm663, %v687, 0.0
      %v707 = vadd.f32 %v705, %v706
      %v708 = vsel %vm663, %v688, 0.0
      %v709 = vadd.f32 %v707, %v708
      %v710 = vsel %vm663, %v689, 0.0
      %v711 = vadd.f32 %v709, %v710
      %v712 = vsel %vm663, %v690, 0.0
      %v713 = vadd.f32 %v711, %v712
      %v714 = vsel %vm663, %v691, 0.0
      %v715 = vadd.f32 %v713, %v714
      %v716 = vsel %vm663, %v692, 0.0
      %v717 = vadd.f32 %v715, %v716
      %v718 = vsel %vm663, %v693, 0.0
      %v719 = vadd.f32 %v717, %v718
      %v720 = vsel %vm663, %v694, 0.0
      %v721 = vadd.f32 %v719, %v720
      %v722 = vsel %vm663, %v695, 0.0
      %v723 = vadd.f32 %v721, %v722
      %v724 = vsel %vm663, %v696, 0.0
      %v725 = vadd.f32 %v723, %v724
      %v726 = vsel %vm663, %v697, 0.0
      %v727 = vadd.f32 %v725, %v726
      %v728 = vsel %vm663, %v698, 0.0
      %v729 = vadd.f32 %v727, %v728
      %730 = vadd.xlane.f32.xlu0 %v729
      %v731 = vpop.xlane.xlu0 %730
      %v732 = vrot.slane %v731, 4
      %v733 = vadd.f32 %v731, %v732
      %v734 = vrot.slane %v733, 2
      %v735 = vadd.f32 %v733, %v734
      %v736 = vrot.slane %v735, 1
      %v737 = vadd.f32 %v735, %v736
      %s738 = vtos %v737
      %v739 = vrcp.pop 128.0
      %s740 = vtos %v739
      %s741 = smul.f32 %s738, %s740
      %s742 = scalar_lea.smem [#allocation3], 0
      %743 = sst [smem:[%s742]] %s741
    $region17: #{tpu_custom_call.1} parent=1 // pred_fallthru
      _
    // Predicated region
    $region18: #{tpu_custom_call.1} parent=1 // pred_check
      _
    $region19: #{tpu_custom_call.1} parent=1 // pred_check_branch
      %745 = sbr.rel (0) target = $region21
    $region20: #{tpu_custom_call.1} parent=1 // pred_region
      %s747 = ssub.s32 16, 16
      %748 = vsyncadd [#allocation4], %s747
      %751 = dma.smem_to_hbm [#allocation3], 16, %s2, [#allocation4]
    $region21: #{tpu_custom_call.1} parent=1 // pred_fallthru
      _
    // Predicated region
    $region22: #{tpu_custom_call.1} parent=1 // pred_check
      _
    $region23: #{tpu_custom_call.1} parent=1 // pred_check_branch
      %753 = sbr.rel (0) target = $region25
    $region24: #{tpu_custom_call.1} parent=1 // pred_region
      %754 = dma.done [#allocation4], 16
    $region25: #{tpu_custom_call.1} parent=1 // pred_fallthru
      _
    %755 = sfence
    %756 = vsyncpa [#allocation4], 1

</llo_original>
